<compile_context>
chip_gen: v7x
topology: tpu7x:2x2x1
jax: 0.10.0
libtpu: 0.0.40
codegen_flags: <defaults>
</compile_context>

<pallas_src>
import jax
import jax.numpy as jnp
import numpy as np
from jax.experimental import pallas as pl
from jax.experimental.pallas import tpu as pltpu

X_DIM = 100
Y_DIM = 21
IN_DIM = X_DIM + Y_DIM        # 121
HID = 100                     # hidden size of net1, also conv sequence length
K = 10                        # conv kernel size
LPAD = 4                      # PyTorch 'same' padding for k=10: left=4, right=5
LANE = 128                    # lane-padded feature width
ONES_LANE = IN_DIM            # spare input lane (121) used to fold bias1 into w1


def _round_up(x, m):
    return ((x + m - 1) // m) * m


# ---------------------------------------------------------------------------
# Kernel: one batch tile (TB, 128) -> (TB, 128)
#   x_ref : (TB, 128)   lanes 0..120 = input, lane 121 = 1.0, rest 0
#   w_ref : (3, 128, 128) stacked [w1 (bias folded), w2, conv-Toeplitz]
#   b_ref : (8, 128)      row 0 = b2, row 1 = conv bias row, rest 0
# ---------------------------------------------------------------------------
def generator_kernel(x_ref, w_ref, b_ref, out_ref):
    x = x_ref[...]                                                  # (TB, 128)
    # Linear 1 + tanh (bias folded into row 121 of w1; padded lanes stay 0)
    h1 = jnp.tanh(jnp.dot(x, w_ref[0], preferred_element_type=jnp.float32))
    # Linear 2 + tanh
    h2 = jnp.tanh(jnp.dot(h1, w_ref[1], preferred_element_type=jnp.float32)
                  + b_ref[0:1, :])
    # Conv1d(1,1,k=10,'same') as a Toeplitz matmul, then ReLU
    c = jnp.dot(h2, w_ref[2], preferred_element_type=jnp.float32) + b_ref[1:2, :]
    out_ref[...] = jnp.maximum(c, 0.0).astype(out_ref.dtype)


# ---------------------------------------------------------------------------
# Parameter construction / preparation
# ---------------------------------------------------------------------------
def init_params(key):
    """Deterministic PyTorch-style uniform init for Linear / Conv1d."""
    ks = jax.random.split(key, 6)

    def uni(k, shape, fan_in):
        bound = 1.0 / np.sqrt(fan_in)
        return jax.random.uniform(k, shape, jnp.float32, -bound, bound)

    # Linear(121 -> 100): stored as (in, out) so forward is x @ W + b
    w1 = uni(ks[0], (IN_DIM, HID), IN_DIM)
    b1 = uni(ks[1], (1, HID), IN_DIM)
    # Linear(100 -> 100)
    w2 = uni(ks[2], (HID, HID), HID)
    b2 = uni(ks[3], (1, HID), HID)
    # Conv1d(1, 1, 10): weight (10,), bias scalar; fan_in = in_ch * k = 10
    w_conv = uni(ks[4], (K,), K)
    b_conv = uni(ks[5], (1, 1), K)
    return w1, b1, w2, b2, w_conv, b_conv


def conv_toeplitz(w_conv):
    """Build M (100,100) with (x @ M)[b,t] = sum_j w[j] * x_padded[b, t-4+j]
    (PyTorch cross-correlation with 'same' padding: left=4, right=5)."""
    s = jnp.arange(HID)[:, None]
    t = jnp.arange(HID)[None, :]
    j = s - t + LPAD
    valid = (j >= 0) & (j < K)
    return jnp.where(valid, w_conv[jnp.clip(j, 0, K - 1)], 0.0).astype(jnp.float32)


def prepare_padded_params(params):
    """Build the lane-padded, stacked kernel operands ONCE.

    Padded lanes/rows are zero, which keeps padded activation lanes exactly
    zero through both tanh layers and the conv matmul, so the final [:, :100]
    slice is exact.  b1 is folded into row `ONES_LANE` (121) of w1; the kernel
    expects x lane 121 == 1.0.
    """
    w1, b1, w2, b2, w_conv, b_conv = params
    mconv = conv_toeplitz(w_conv)                                   # (100,100)

    w1p = (jnp.zeros((LANE, LANE), jnp.float32)
           .at[:IN_DIM, :HID].set(w1)
           .at[ONES_LANE, :HID].set(b1[0]))                         # bias fold
    w2p = jnp.zeros((LANE, LANE), jnp.float32).at[:HID, :HID].set(w2)
    mconvp = jnp.zeros((LANE, LANE), jnp.float32).at[:HID, :HID].set(mconv)
    w_stack = jnp.stack([w1p, w2p, mconvp], axis=0)                 # (3,128,128)

    b_stack = (jnp.zeros((8, LANE), jnp.float32)
               .at[0, :HID].set(b2[0])
               .at[1, :HID].set(jnp.broadcast_to(b_conv[0, 0], (HID,))))
    return w_stack, b_stack


# ---------------------------------------------------------------------------
# Forward wrapper
# ---------------------------------------------------------------------------
def generator_forward(x, padded_params, *, tb=512):
    """x: (B, 121) f32 -> (B, 100) f32. `padded_params` from prepare_padded_params."""
    w_stack, b_stack = padded_params
    B = x.shape[0]

    # Batch tile: multiple of 8 sublanes, capped at `tb`.
    TB = min(tb, _round_up(B, 8))
    Bp = _round_up(B, TB)

    # Lane-pad x to 128, row-pad batch, and set the constant-ones lane (bias1).
    xp = (jnp.zeros((Bp, LANE), jnp.float32)
          .at[:B, :IN_DIM].set(x)
          .at[:, ONES_LANE].set(1.0))

    const = lambda shape: pl.BlockSpec(shape, lambda i: (0,) * len(shape))
    n_tiles = Bp // TB

    cost = pl.CostEstimate(
        flops=3 * 2 * Bp * LANE * LANE,
        transcendentals=2 * Bp * LANE,
        bytes_accessed=(xp.size + Bp * LANE + w_stack.size + b_stack.size) * 4,
    )

    out = pl.pallas_call(
        generator_kernel,
        out_shape=jax.ShapeDtypeStruct((Bp, LANE), jnp.float32),
        grid_spec=pltpu.PrefetchScalarGridSpec(
            num_scalar_prefetch=0,
            grid=(n_tiles,),
            in_specs=[
                pl.BlockSpec((TB, LANE), lambda i: (i, 0)),   # x tile (pipelined)
                const((3, LANE, LANE)),                       # stacked weights (resident)
                const((8, LANE)),                             # stacked bias rows
            ],
            out_specs=pl.BlockSpec((TB, LANE), lambda i: (i, 0)),
        ),
        compiler_params=pltpu.CompilerParams(
            # Batch tiles are independent -> megacore sharding on v7x.
            dimension_semantics=("parallel",)),
        cost_estimate=cost,
    )(xp, w_stack, b_stack)

    return out[:B, :HID]


# ---------------------------------------------------------------------------
# Pure-JAX reference matching the PyTorch forward
# ---------------------------------------------------------------------------
def generator_reference(x, params):
    w1, b1, w2, b2, w_conv, b_conv = params
    h1 = jnp.tanh(x @ w1 + b1)
    h2 = jnp.tanh(h1 @ w2 + b2)
    # Conv1d 'same': pad left 4, right 5, cross-correlation
    hp = jnp.pad(h2, ((0, 0), (LPAD, K - 1 - LPAD)))
    c = sum(w_conv[j] * hp[:, j:j + HID] for j in range(K)) + b_conv[0, 0]
    return jnp.maximum(c, 0.0)


if __name__ == "__main__":
    key = jax.random.PRNGKey(0)
    k_param, k_x1, k_x2 = jax.random.split(key, 3)
    params = init_params(k_param)
    padded_params = prepare_padded_params(params)   # built once, reused

    fwd = jax.jit(generator_forward, static_argnames=("tb",))

    # Small demo batch (single tile).
    B = 4
    x = jax.random.normal(k_x1, (B, IN_DIM), jnp.float32)
    out = jax.block_until_ready(fwd(x, padded_params))
    ref = generator_reference(x, params)
    np.testing.assert_allclose(np.asarray(out), np.asarray(ref),
                               rtol=1e-5, atol=1e-5)
    assert out.shape == (B, HID)

    # Multi-tile / ragged-batch check (exercises the batch-tiled grid path).
    B2 = 20
    x2 = jax.random.normal(k_x2, (B2, IN_DIM), jnp.float32)
    out2 = jax.block_until_ready(fwd(x2, padded_params, tb=8))
    ref2 = generator_reference(x2, params)
    np.testing.assert_allclose(np.asarray(out2), np.asarray(ref2),
                               rtol=1e-5, atol=1e-5)
    assert out2.shape == (B2, HID)

    print("KERNEL_OK")
</pallas_src>

<mosaic_0001>
module attributes {stable_mosaic.version = 11 : i64} {
  func.func @generator_kernel(%arg0: i32, %arg1: memref<8x128xf32, #tpu.memory_space<vmem>>, %arg2: memref<3x128x128xf32, #tpu.memory_space<vmem>>, %arg3: memref<8x128xf32, #tpu.memory_space<vmem>>, %arg4: memref<8x128xf32, #tpu.memory_space<vmem>>) attributes {dimension_semantics = [#tpu.dimension_semantics<parallel>], iteration_bounds = array<i64: 1>, scalar_prefetch = 0 : i64, scratch_operands = 0 : i64, tpu.core_type = #tpu.core_type<tc>, window_params = [{transform_indices = @transform_0, window_bounds = array<i64: 8, 128>}, {pipeline_mode = #tpu.pipeline_mode<synchronous>, transform_indices = @transform_1, window_bounds = array<i64: 3, 128, 128>}, {pipeline_mode = #tpu.pipeline_mode<synchronous>, transform_indices = @transform_2, window_bounds = array<i64: 8, 128>}, {transform_indices = @transform_3, window_bounds = array<i64: 8, 128>}]} {
    %c0 = arith.constant 0 : index
    %c0_0 = arith.constant 0 : index
    %0 = vector.load %arg1[%c0, %c0_0] : memref<8x128xf32, #tpu.memory_space<vmem>>, vector<8x128xf32>
    %c0_1 = arith.constant 0 : index
    %c0_2 = arith.constant 0 : index
    %c0_3 = arith.constant 0 : index
    %1 = vector.load %arg2[%c0_1, %c0_2, %c0_3] : memref<3x128x128xf32, #tpu.memory_space<vmem>>, vector<1x128x128xf32>
    %2 = vector.shape_cast %1 : vector<1x128x128xf32> to vector<128x128xf32>
    %cst = arith.constant dense<0.000000e+00> : vector<8x128xf32>
    %3 = tpu.matmul %0, %2, %cst {dimension_numbers = #tpu.dot_dimension_numbers<[1], [0], [0], [1], [0, 0, 1, 1], [], []>} : vector<8x128xf32>, vector<128x128xf32>, vector<8x128xf32> -> vector<8x128xf32>
    %4 = math.tanh %3 : vector<8x128xf32>
    %c1 = arith.constant 1 : index
    %c0_4 = arith.constant 0 : index
    %c0_5 = arith.constant 0 : index
    %5 = vector.load %arg2[%c1, %c0_4, %c0_5] : memref<3x128x128xf32, #tpu.memory_space<vmem>>, vector<1x128x128xf32>
    %6 = vector.shape_cast %5 : vector<1x128x128xf32> to vector<128x128xf32>
    %cst_6 = arith.constant dense<0.000000e+00> : vector<8x128xf32>
    %7 = tpu.matmul %4, %6, %cst_6 {dimension_numbers = #tpu.dot_dimension_numbers<[1], [0], [0], [1], [0, 0, 1, 1], [], []>} : vector<8x128xf32>, vector<128x128xf32>, vector<8x128xf32> -> vector<8x128xf32>
    %c0_7 = arith.constant 0 : index
    %c0_8 = arith.constant 0 : index
    %8 = vector.load %arg3[%c0_7, %c0_8] : memref<8x128xf32, #tpu.memory_space<vmem>>, vector<1x128xf32>
    %9 = vector.broadcast %8 : vector<1x128xf32> to vector<8x128xf32>
    %10 = arith.addf %7, %9 : vector<8x128xf32>
    %11 = math.tanh %10 : vector<8x128xf32>
    %c2 = arith.constant 2 : index
    %c0_9 = arith.constant 0 : index
    %c0_10 = arith.constant 0 : index
    %12 = vector.load %arg2[%c2, %c0_9, %c0_10] : memref<3x128x128xf32, #tpu.memory_space<vmem>>, vector<1x128x128xf32>
    %13 = vector.shape_cast %12 : vector<1x128x128xf32> to vector<128x128xf32>
    %cst_11 = arith.constant dense<0.000000e+00> : vector<8x128xf32>
    %14 = tpu.matmul %11, %13, %cst_11 {dimension_numbers = #tpu.dot_dimension_numbers<[1], [0], [0], [1], [0, 0, 1, 1], [], []>} : vector<8x128xf32>, vector<128x128xf32>, vector<8x128xf32> -> vector<8x128xf32>
    %c1_12 = arith.constant 1 : index
    %c0_13 = arith.constant 0 : index
    %15 = vector.load %arg3[%c1_12, %c0_13] : memref<8x128xf32, #tpu.memory_space<vmem>>, vector<1x128xf32>
    %16 = vector.broadcast %15 : vector<1x128xf32> to vector<8x128xf32>
    %17 = arith.addf %14, %16 : vector<8x128xf32>
    %cst_14 = arith.constant 0.000000e+00 : f32
    %18 = vector.broadcast %cst_14 : f32 to vector<8x128xf32>
    %19 = arith.maximumf %17, %18 : vector<8x128xf32>
    %c0_15 = arith.constant 0 : index
    %c0_16 = arith.constant 0 : index
    %20 = vector.load %arg4[%c0_15, %c0_16] : memref<8x128xf32, #tpu.memory_space<vmem>>, vector<8x128xf32>
    tpu.vector_store %arg4[%c0_15, %c0_16], %19 {strides = array<i32>} : memref<8x128xf32, #tpu.memory_space<vmem>>, vector<8x128xf32>,
    return
  }
  func.func @transform_0(%arg0: i32) -> (i32, i32) {
    %c0_i32 = arith.constant 0 : i32
    %c0_i32_0 = arith.constant 0 : i32
    return %arg0, %c0_i32 : i32, i32
  }
  func.func @transform_1(%arg0: i32) -> (i32, i32, i32) {
    %c0_i32 = arith.constant 0 : i32
    %c0_i32_0 = arith.constant 0 : i32
    %c0_i32_1 = arith.constant 0 : i32
    %c0_i32_2 = arith.constant 0 : i32
    return %c0_i32, %c0_i32_0, %c0_i32_1 : i32, i32, i32
  }
  func.func @transform_2(%arg0: i32) -> (i32, i32) {
    %c0_i32 = arith.constant 0 : i32
    %c0_i32_0 = arith.constant 0 : i32
    %c0_i32_1 = arith.constant 0 : i32
    return %c0_i32, %c0_i32_0 : i32, i32
  }
  func.func @transform_3(%arg0: i32) -> (i32, i32) {
    %c0_i32 = arith.constant 0 : i32
    %c0_i32_0 = arith.constant 0 : i32
    return %arg0, %c0_i32 : i32, i32
  }
}

</mosaic_0001>

<llo_original>
// kernel: generator_forward.1
$region0: #{generator_forward.1}
  #allocation0 [shape = 'u32[]', space=smem, size = 0x4, offset = 0x4, fixed_abs, tag = 'smem constant byte address 0x4 - core index']
  #allocation1 [shape = 'u32[144,128]{1,0:T(1,128)}', space=vmem, size = 0x12000, scoped, tag = 'internal scratch']
  %s0 = inlined_call_operand.vmem [shape: f32[8,128], index: 0, kind: input, shape index: {}]
  %s1 = inlined_call_operand.hbm [shape: f32[3,128,128], index: 1, kind: input, shape index: {}]
  %s2 = inlined_call_operand.vmem [shape: f32[8,128], index: 2, kind: input, shape index: {}]
  %s3 = inlined_call_operand.vmem [shape: f32[8,128], index: 3, kind: output, shape index: {}]
  %s4 = sld [smem:[#allocation0]]
  $region26: #{generator_forward.1} parent=0
    _
  %s6 = ssub.s32 1, %s4
  %s7 = scalar_select 0, %s6, %s4
  $region1: #{generator_forward.1} parent=0
    #allocation2 [shape = 'u8[196608]{0}', space=vmem, size = 0x30000, scoped, tag = 'input window, operand 1, single buffered']
    #allocation3 [shape = 's32[1]{0}', space=sflag, size = 0x4, scoped, tag = 'scoped memory for generator_forward.1']
    %8 = vsyncpa [#allocation3], 0
    // Predicated region
    $region2: #{generator_forward.1} parent=1 // pred_check
      _
    $region3: #{generator_forward.1} parent=1 // pred_check_branch
      %10 = sbr.rel (0) target = $region5
    $region4: #{generator_forward.1} parent=1 // pred_region
      _
    $region5: #{generator_forward.1} parent=1 // pred_fallthru
      _
    // Predicated region
    $region6: #{generator_forward.1} parent=1 // pred_check
      _
    $region7: #{generator_forward.1} parent=1 // pred_check_branch
      %12 = sbr.rel (0) target = $region9
    $region8: #{generator_forward.1} parent=1 // pred_region
      %s14 = ssub.s32 6144, 6144
      %15 = vsyncadd [#allocation3], %s14
      %s16 = sshll.u32 [#allocation2], 4
      %s17 = int_to_ptr.vmem [resolvable:$true] %s16
      %22 = dma.hbm_to_vmem [thread:$0]  %s1, 6144, %s17, [#allocation3], 128, 128, 8
    $region9: #{generator_forward.1} parent=1 // pred_fallthru
      _
    // Predicated region
    $region10: #{generator_forward.1} parent=1 // pred_check
      _
    $region11: #{generator_forward.1} parent=1 // pred_check_branch
      %24 = sbr.rel (0) target = $region13
    $region12: #{generator_forward.1} parent=1 // pred_region
      _
    $region13: #{generator_forward.1} parent=1 // pred_fallthru
      _
    // Predicated region
    $region14: #{generator_forward.1} parent=1 // pred_check
      _
    $region15: #{generator_forward.1} parent=1 // pred_check_branch
      %26 = sbr.rel (0) target = $region17
    $region16: #{generator_forward.1} parent=1 // pred_region
      %27 = dma.done [#allocation3], 6144
    $region17: #{generator_forward.1} parent=1 // pred_fallthru
      _
    %v28 = vld [vmem:[%s0] sm:$0xff]
    %v29 = vld [vmem:[#allocation2] sm:$0xff]
    %v30 = vld [vmem:[#allocation2 + $0x8] sm:$0xff]
    %v31 = vld [vmem:[#allocation2 + $0x10] sm:$0xff]
    %v32 = vld [vmem:[#allocation2 + $0x18] sm:$0xff]
    %v33 = vld [vmem:[#allocation2 + $0x20] sm:$0xff]
    %v34 = vld [vmem:[#allocation2 + $0x28] sm:$0xff]
    %v35 = vld [vmem:[#allocation2 + $0x30] sm:$0xff]
    %v36 = vld [vmem:[#allocation2 + $0x38] sm:$0xff]
    %v37 = vld [vmem:[#allocation2 + $0x40] sm:$0xff]
    %v38 = vld [vmem:[#allocation2 + $0x48] sm:$0xff]
    %v39 = vld [vmem:[#allocation2 + $0x50] sm:$0xff]
    %v40 = vld [vmem:[#allocation2 + $0x58] sm:$0xff]
    %v41 = vld [vmem:[#allocation2 + $0x60] sm:$0xff]
    %v42 = vld [vmem:[#allocation2 + $0x68] sm:$0xff]
    %v43 = vld [vmem:[#allocation2 + $0x70] sm:$0xff]
    %v44 = vld [vmem:[#allocation2 + $0x78] sm:$0xff]
    %45 = vmatprep.subr.mxu0 0.0
    %46 = vmatpush1.msra.mxu0 %v29
    %47 = vmatprep.subr.mxu0 0.0
    %48 = vmatpush1.msra.mxu0 %v30
    %49 = vmatprep.subr.mxu0 0.0
    %50 = vmatpush1.msra.mxu0 %v31
    %51 = vmatprep.subr.mxu0 0.0
    %52 = vmatpush1.msra.mxu0 %v32
    %53 = vmatprep.subr.mxu0 0.0
    %54 = vmatpush1.msra.mxu0 %v33
    %55 = vmatprep.subr.mxu0 0.0
    %56 = vmatpush1.msra.mxu0 %v34
    %57 = vmatprep.subr.mxu0 0.0
    %58 = vmatpush1.msra.mxu0 %v35
    %59 = vmatprep.subr.mxu0 0.0
    %60 = vmatpush1.msra.mxu0 %v36
    %61 = vmatprep.subr.mxu0 0.0
    %62 = vmatpush1.msra.mxu0 %v37
    %63 = vmatprep.subr.mxu0 0.0
    %64 = vmatpush1.msra.mxu0 %v38
    %65 = vmatprep.subr.mxu0 0.0
    %66 = vmatpush1.msra.mxu0 %v39
    %67 = vmatprep.subr.mxu0 0.0
    %68 = vmatpush1.msra.mxu0 %v40
    %69 = vmatprep.subr.mxu0 0.0
    %70 = vmatpush1.msra.mxu0 %v41
    %71 = vmatprep.subr.mxu0 0.0
    %72 = vmatpush1.msra.mxu0 %v42
    %73 = vmatprep.subr.mxu0 0.0
    %74 = vmatpush1.msra.mxu0 %v43
    %75 = vmatprep.subr.mxu0 0.0
    %76 = vmatpush1.msra.mxu0 %v44
    %77 = vmatprep.subr.mxu0 0.0
    %78 = vmatpush1.msra.mxu0 0.0
    %79 = vmatprep.subr.mxu0 0.0
    %80 = vmatpush1.msra.mxu0 0.0
    %81 = vmatprep.subr.mxu0 0.0
    %82 = vmatpush1.msra.mxu0 0.0
    %83 = vmatprep.subr.mxu0 0.0
    %84 = vmatpush1.msra.mxu0 0.0
    %85 = vmatprep.subr.mxu0 0.0
    %86 = vmatpush1.msra.mxu0 0.0
    %87 = vmatprep.subr.mxu0 0.0
    %88 = vmatpush1.msra.mxu0 0.0
    %89 = vmatprep.subr.mxu0 0.0
    %90 = vmatpush1.msra.mxu0 0.0
    %91 = vmatprep.subr.mxu0 0.0
    %92 = vmatpush1.msra.mxu0 0.0
    %93 = vmatprep.subr.mxu0 0.0
    %94 = vmatpush1.msra.mxu0 0.0
    %95 = vmatprep.subr.mxu0 0.0
    %96 = vmatpush1.msra.mxu0 0.0
    %97 = vmatprep.subr.mxu0 0.0
    %98 = vmatpush1.msra.mxu0 0.0
    %99 = vmatprep.subr.mxu0 0.0
    %100 = vmatpush1.msra.mxu0 0.0
    %101 = vmatprep.subr.mxu0 0.0
    %102 = vmatpush1.msra.mxu0 0.0
    %103 = vmatprep.subr.mxu0 0.0
    %104 = vmatpush1.msra.mxu0 0.0
    %105 = vmatprep.subr.mxu0 0.0
    %106 = vmatpush1.msra.mxu0 0.0
    %107 = vmatprep.subr.mxu0 0.0
    %108 = vmatpush1.msra.mxu0 0.0
    %109 = vmatprep.mubr.f32.mxu0 0.0
    %110 = vmatmul.mubr.f32.gmra.mrb[0].mxu0 %v28
    %v111 = vpop.f32.mrb[0].mxu0
    %v112 = vadd.f32 0.0, %v111
    %v113 = vpop.f32.mrb[0].mxu0
    %114 = vdwg.mxu0
    %v115 = vtanh.pop %v112
    %s116 = scalar_lea.vmem [#allocation2], 128
    %v117 = vld [vmem:[%s116] sm:$0xff]
    %v118 = vld [vmem:[%s116 + $0x8] sm:$0xff]
    %v119 = vld [vmem:[%s116 + $0x10] sm:$0xff]
    %v120 = vld [vmem:[%s116 + $0x18] sm:$0xff]
    %v121 = vld [vmem:[%s116 + $0x20] sm:$0xff]
    %v122 = vld [vmem:[%s116 + $0x28] sm:$0xff]
    %v123 = vld [vmem:[%s116 + $0x30] sm:$0xff]
    %v124 = vld [vmem:[%s116 + $0x38] sm:$0xff]
    %v125 = vld [vmem:[%s116 + $0x40] sm:$0xff]
    %v126 = vld [vmem:[%s116 + $0x48] sm:$0xff]
    %v127 = vld [vmem:[%s116 + $0x50] sm:$0xff]
    %v128 = vld [vmem:[%s116 + $0x58] sm:$0xff]
    %v129 = vld [vmem:[%s116 + $0x60] sm:$0xff]
    %v130 = vld [vmem:[%s116 + $0x68] sm:$0xff]
    %v131 = vld [vmem:[%s116 + $0x70] sm:$0xff]
    %v132 = vld [vmem:[%s116 + $0x78] sm:$0xff]
    %v133 = vld [vmem:[%s2] sm:$0x1]
    %v134 = vlaneseq
    %v135 = vshrl.u32 %v134, 7
    %v136 = vsub.s32 0, %v135
    %v137 = vrot.slane %v133, %v136
    %138 = vmatprep.subr.mxu0 0.0
    %139 = vmatpush1.msra.mxu0 %v117
    %140 = vmatprep.subr.mxu0 0.0
    %141 = vmatpush1.msra.mxu0 %v118
    %142 = vmatprep.subr.mxu0 0.0
    %143 = vmatpush1.msra.mxu0 %v119
    %144 = vmatprep.subr.mxu0 0.0
    %145 = vmatpush1.msra.mxu0 %v120
    %146 = vmatprep.subr.mxu0 0.0
    %147 = vmatpush1.msra.mxu0 %v121
    %148 = vmatprep.subr.mxu0 0.0
    %149 = vmatpush1.msra.mxu0 %v122
    %150 = vmatprep.subr.mxu0 0.0
    %151 = vmatpush1.msra.mxu0 %v123
    %152 = vmatprep.subr.mxu0 0.0
    %153 = vmatpush1.msra.mxu0 %v124
    %154 = vmatprep.subr.mxu0 0.0
    %155 = vmatpush1.msra.mxu0 %v125
    %156 = vmatprep.subr.mxu0 0.0
    %157 = vmatpush1.msra.mxu0 %v126
    %158 = vmatprep.subr.mxu0 0.0
    %159 = vmatpush1.msra.mxu0 %v127
    %160 = vmatprep.subr.mxu0 0.0
    %161 = vmatpush1.msra.mxu0 %v128
    %162 = vmatprep.subr.mxu0 0.0
    %163 = vmatpush1.msra.mxu0 %v129
    %164 = vmatprep.subr.mxu0 0.0
    %165 = vmatpush1.msra.mxu0 %v130
    %166 = vmatprep.subr.mxu0 0.0
    %167 = vmatpush1.msra.mxu0 %v131
    %168 = vmatprep.subr.mxu0 0.0
    %169 = vmatpush1.msra.mxu0 %v132
    %170 = vmatprep.subr.mxu0 0.0
    %171 = vmatpush1.msra.mxu0 0.0
    %172 = vmatprep.subr.mxu0 0.0
    %173 = vmatpush1.msra.mxu0 0.0
    %174 = vmatprep.subr.mxu0 0.0
    %175 = vmatpush1.msra.mxu0 0.0
    %176 = vmatprep.subr.mxu0 0.0
    %177 = vmatpush1.msra.mxu0 0.0
    %178 = vmatprep.subr.mxu0 0.0
    %179 = vmatpush1.msra.mxu0 0.0
    %180 = vmatprep.subr.mxu0 0.0
    %181 = vmatpush1.msra.mxu0 0.0
    %182 = vmatprep.subr.mxu0 0.0
    %183 = vmatpush1.msra.mxu0 0.0
    %184 = vmatprep.subr.mxu0 0.0
    %185 = vmatpush1.msra.mxu0 0.0
    %186 = vmatprep.subr.mxu0 0.0
    %187 = vmatpush1.msra.mxu0 0.0
    %188 = vmatprep.subr.mxu0 0.0
    %189 = vmatpush1.msra.mxu0 0.0
    %190 = vmatprep.subr.mxu0 0.0
    %191 = vmatpush1.msra.mxu0 0.0
    %192 = vmatprep.subr.mxu0 0.0
    %193 = vmatpush1.msra.mxu0 0.0
    %194 = vmatprep.subr.mxu0 0.0
    %195 = vmatpush1.msra.mxu0 0.0
    %196 = vmatprep.subr.mxu0 0.0
    %197 = vmatpush1.msra.mxu0 0.0
    %198 = vmatprep.subr.mxu0 0.0
    %199 = vmatpush1.msra.mxu0 0.0
    %200 = vmatprep.subr.mxu0 0.0
    %201 = vmatpush1.msra.mxu0 0.0
    %202 = vmatprep.mubr.f32.mxu0 0.0
    %203 = vmatmul.mubr.f32.gmra.mrb[0].mxu0 %v115
    %v204 = vpop.f32.mrb[0].mxu0
    %v205 = vadd.f32 %v137, %v204
    %v206 = vpop.f32.mrb[0].mxu0
    %207 = vdwg.mxu0
    %v208 = vtanh.pop %v205
    %s209 = scalar_lea.vmem [#allocation2], 256
    %v210 = vld [vmem:[%s209] sm:$0xff]
    %v211 = vld [vmem:[%s209 + $0x8] sm:$0xff]
    %v212 = vld [vmem:[%s209 + $0x10] sm:$0xff]
    %v213 = vld [vmem:[%s209 + $0x18] sm:$0xff]
    %v214 = vld [vmem:[%s209 + $0x20] sm:$0xff]
    %v215 = vld [vmem:[%s209 + $0x28] sm:$0xff]
    %v216 = vld [vmem:[%s209 + $0x30] sm:$0xff]
    %v217 = vld [vmem:[%s209 + $0x38] sm:$0xff]
    %v218 = vld [vmem:[%s209 + $0x40] sm:$0xff]
    %v219 = vld [vmem:[%s209 + $0x48] sm:$0xff]
    %v220 = vld [vmem:[%s209 + $0x50] sm:$0xff]
    %v221 = vld [vmem:[%s209 + $0x58] sm:$0xff]
    %v222 = vld [vmem:[%s209 + $0x60] sm:$0xff]
    %v223 = vld [vmem:[%s209 + $0x68] sm:$0xff]
    %v224 = vld [vmem:[%s209 + $0x70] sm:$0xff]
    %v225 = vld [vmem:[%s209 + $0x78] sm:$0xff]
    %v226 = vld [vmem:[%s2 + $0x1] sm:$0x1]
    %v227 = vlaneseq
    %v228 = vshrl.u32 %v227, 7
    %v229 = vsub.s32 0, %v228
    %v230 = vrot.slane %v226, %v229
    %231 = vmatprep.subr.mxu0 0.0
    %232 = vmatpush1.msra.mxu0 %v210
    %233 = vmatprep.subr.mxu0 0.0
    %234 = vmatpush1.msra.mxu0 %v211
    %235 = vmatprep.subr.mxu0 0.0
    %236 = vmatpush1.msra.mxu0 %v212
    %237 = vmatprep.subr.mxu0 0.0
    %238 = vmatpush1.msra.mxu0 %v213
    %239 = vmatprep.subr.mxu0 0.0
    %240 = vmatpush1.msra.mxu0 %v214
    %241 = vmatprep.subr.mxu0 0.0
    %242 = vmatpush1.msra.mxu0 %v215
    %243 = vmatprep.subr.mxu0 0.0
    %244 = vmatpush1.msra.mxu0 %v216
    %245 = vmatprep.subr.mxu0 0.0
    %246 = vmatpush1.msra.mxu0 %v217
    %247 = vmatprep.subr.mxu0 0.0
    %248 = vmatpush1.msra.mxu0 %v218
    %249 = vmatprep.subr.mxu0 0.0
    %250 = vmatpush1.msra.mxu0 %v219
    %251 = vmatprep.subr.mxu0 0.0
    %252 = vmatpush1.msra.mxu0 %v220
    %253 = vmatprep.subr.mxu0 0.0
    %254 = vmatpush1.msra.mxu0 %v221
    %255 = vmatprep.subr.mxu0 0.0
    %256 = vmatpush1.msra.mxu0 %v222
    %257 = vmatprep.subr.mxu0 0.0
    %258 = vmatpush1.msra.mxu0 %v223
    %259 = vmatprep.subr.mxu0 0.0
    %260 = vmatpush1.msra.mxu0 %v224
    %261 = vmatprep.subr.mxu0 0.0
    %262 = vmatpush1.msra.mxu0 %v225
    %263 = vmatprep.subr.mxu0 0.0
    %264 = vmatpush1.msra.mxu0 0.0
    %265 = vmatprep.subr.mxu0 0.0
    %266 = vmatpush1.msra.mxu0 0.0
    %267 = vmatprep.subr.mxu0 0.0
    %268 = vmatpush1.msra.mxu0 0.0
    %269 = vmatprep.subr.mxu0 0.0
    %270 = vmatpush1.msra.mxu0 0.0
    %271 = vmatprep.subr.mxu0 0.0
    %272 = vmatpush1.msra.mxu0 0.0
    %273 = vmatprep.subr.mxu0 0.0
    %274 = vmatpush1.msra.mxu0 0.0
    %275 = vmatprep.subr.mxu0 0.0
    %276 = vmatpush1.msra.mxu0 0.0
    %277 = vmatprep.subr.mxu0 0.0
    %278 = vmatpush1.msra.mxu0 0.0
    %279 = vmatprep.subr.mxu0 0.0
    %280 = vmatpush1.msra.mxu0 0.0
    %281 = vmatprep.subr.mxu0 0.0
    %282 = vmatpush1.msra.mxu0 0.0
    %283 = vmatprep.subr.mxu0 0.0
    %284 = vmatpush1.msra.mxu0 0.0
    %285 = vmatprep.subr.mxu0 0.0
    %286 = vmatpush1.msra.mxu0 0.0
    %287 = vmatprep.subr.mxu0 0.0
    %288 = vmatpush1.msra.mxu0 0.0
    %289 = vmatprep.subr.mxu0 0.0
    %290 = vmatpush1.msra.mxu0 0.0
    %291 = vmatprep.subr.mxu0 0.0
    %292 = vmatpush1.msra.mxu0 0.0
    %293 = vmatprep.subr.mxu0 0.0
    %294 = vmatpush1.msra.mxu0 0.0
    %295 = vmatprep.mubr.f32.mxu0 0.0
    %296 = vmatmul.mubr.f32.gmra.mrb[0].mxu0 %v208
    %v297 = vpop.f32.mrb[0].mxu0
    %v298 = vadd.f32 %v230, %v297
    %v299 = vpop.f32.mrb[0].mxu0
    %300 = vdwg.mxu0
    %v301 = vmax.f32 %v298, 0.0
    %302 = vst [vmem:[%s3] sm:$0xff] %v301
    // Predicated region
    $region18: #{generator_forward.1} parent=1 // pred_check
      _
    $region19: #{generator_forward.1} parent=1 // pred_check_branch
      %304 = sbr.rel (0) target = $region21
    $region20: #{generator_forward.1} parent=1 // pred_region
      _
    $region21: #{generator_forward.1} parent=1 // pred_fallthru
      _
    // Predicated region
    $region22: #{generator_forward.1} parent=1 // pred_check
      _
    $region23: #{generator_forward.1} parent=1 // pred_check_branch
      %306 = sbr.rel (0) target = $region25
    $region24: #{generator_forward.1} parent=1 // pred_region
      _
    $region25: #{generator_forward.1} parent=1 // pred_fallthru
      _
    %307 = vsyncpa [#allocation3], 1

</llo_original>
